<compile_context>
chip_gen: v6e
topology: v6e:2x2x1
jax: 0.10.0
libtpu: 0.0.40
codegen_flags: <defaults>
</compile_context>

<pallas_src>
import functools

import jax
import jax.numpy as jnp
from jax.experimental import pallas as pl


# ---------------------------------------------------------------------------
# Fused scaled dot-product attention kernel (whole problem resident in VMEM)
# ---------------------------------------------------------------------------
def _sdpa_kernel(*refs, scale, has_mask):
    if has_mask:
        q_ref, k_ref, v_ref, m_ref, ctx_ref, attn_ref = refs
    else:
        q_ref, k_ref, v_ref, ctx_ref, attn_ref = refs

    q = q_ref[...]                      # (B, Lq, Dk)
    k = k_ref[...]                      # (B, Lk, Dk)
    v = v_ref[...]                      # (B, Lk, Dv)

    # scores = bmm(q, k^T): contract last dims, batch over B (no transpose).
    s = jnp.einsum("bld,bmd->blm", q, k, preferred_element_type=jnp.float32)
    if scale is not None:
        s = s * scale
    if has_mask:
        # torch masked_fill_(attn_mask, -inf): nonzero mask entry => -inf.
        s = jnp.where(m_ref[...] != 0, -jnp.inf, s)

    # softmax over dim=2 (last dim), numerically stable.
    m = jnp.max(s, axis=-1, keepdims=True)
    p = jnp.exp(s - m)
    denom = jnp.sum(p, axis=-1, keepdims=True)
    attn = p * pl.reciprocal(denom, approx=False)

    # dropout(p=0.0) is the identity.
    attn_ref[...] = attn.astype(attn_ref.dtype)

    # context = bmm(attention, v)
    ctx = jnp.einsum("blm,bmd->bld", attn, v.astype(jnp.float32),
                     preferred_element_type=jnp.float32)
    ctx_ref[...] = ctx.astype(ctx_ref.dtype)


def scaled_dot_product_attention(q, k, v, scale=None, attn_mask=None):
    """Pallas implementation of ScaledDotProductAttention.forward.

    q: (B, Lq, Dk), k: (B, Lk, Dk), v: (B, Lk, Dv)
    scale: optional python float
    attn_mask: optional (B, Lq, Lk) boolean/int mask (nonzero => -inf)
    Returns (context (B, Lq, Dv), attention (B, Lq, Lk)).
    """
    B, Lq, _ = q.shape
    _, Lk, Dv = v.shape

    has_mask = attn_mask is not None
    args = [q, k, v]
    if has_mask:
        args.append(attn_mask.astype(jnp.int32))

    kernel = functools.partial(_sdpa_kernel,
                               scale=None if scale is None else float(scale),
                               has_mask=has_mask)

    out_shape = (jax.ShapeDtypeStruct((B, Lq, Dv), q.dtype),
                 jax.ShapeDtypeStruct((B, Lq, Lk), jnp.float32))

    # Single un-gridded launch: every operand/output is a whole-array VMEM
    # block (the entire problem is a few KB, far under any VMEM limit).
    ctx, attn = pl.pallas_call(kernel, out_shape=out_shape)(*args)
    return ctx, attn


# ---------------------------------------------------------------------------
# Pure-JAX reference (mirrors the PyTorch module)
# ---------------------------------------------------------------------------
def reference(q, k, v, scale=None, attn_mask=None):
    s = jnp.einsum("bld,bmd->blm", q, k)
    if scale is not None:
        s = s * scale
    if attn_mask is not None:
        s = jnp.where(attn_mask, -jnp.inf, s)
    attn = jax.nn.softmax(s, axis=-1)
    ctx = jnp.einsum("blm,bmd->bld", attn, v)
    return ctx, attn


if __name__ == "__main__":
    B, L, D = 2, 8, 48

    root = jax.random.PRNGKey(0)
    kq, kk, kv = jax.random.split(root, 3)
    q = jax.random.normal(kq, (B, L, D), jnp.float32)
    k = jax.random.normal(kk, (B, L, D), jnp.float32)
    v = jax.random.normal(kv, (B, L, D), jnp.float32)

    scale = float(D) ** -0.5

    # boolean mask [B, L, L]; True => masked with -inf (every row keeps >=1 valid)
    rows = jnp.arange(L)[:, None]
    cols = jnp.arange(L)[None, :]
    attn_mask = jnp.broadcast_to(cols > rows, (B, L, L))

    # masked + scaled path
    ctx, attn = scaled_dot_product_attention(q, k, v, scale=scale,
                                             attn_mask=attn_mask)
    ctx = jax.block_until_ready(ctx)
    attn = jax.block_until_ready(attn)

    ref_ctx, ref_attn = reference(q, k, v, scale, attn_mask)
    assert ctx.shape == (B, L, D) and attn.shape == (B, L, L)
    assert jnp.allclose(ctx, ref_ctx, atol=1e-5, rtol=1e-5)
    assert jnp.allclose(attn, ref_attn, atol=1e-5, rtol=1e-5)

    # no-mask / no-scale path (scale=None, attn_mask=None branches)
    ctx2, attn2 = scaled_dot_product_attention(q, k, v)
    ctx2 = jax.block_until_ready(ctx2)
    attn2 = jax.block_until_ready(attn2)
    ref_ctx2, ref_attn2 = reference(q, k, v)
    assert jnp.allclose(ctx2, ref_ctx2, atol=1e-5, rtol=1e-5)
    assert jnp.allclose(attn2, ref_attn2, atol=1e-5, rtol=1e-5)

    print("KERNEL_OK")
</pallas_src>

<mosaic_0001>
module attributes {stable_mosaic.version = 11 : i64} {
  func.func @_sdpa_kernel(%arg0: memref<2x8x48xf32, #tpu.memory_space<vmem>>, %arg1: memref<2x8x48xf32, #tpu.memory_space<vmem>>, %arg2: memref<2x8x48xf32, #tpu.memory_space<vmem>>, %arg3: memref<2x8x8xi32, #tpu.memory_space<vmem>>, %arg4: memref<2x8x48xf32, #tpu.memory_space<vmem>>, %arg5: memref<2x8x8xf32, #tpu.memory_space<vmem>>) attributes {dimension_semantics = [], scalar_prefetch = 0 : i64, scratch_operands = 0 : i64, tpu.core_type = #tpu.core_type<tc>} {
    %c0 = arith.constant 0 : index
    %c0_0 = arith.constant 0 : index
    %c0_1 = arith.constant 0 : index
    %0 = vector.load %arg0[%c0, %c0_0, %c0_1] : memref<2x8x48xf32, #tpu.memory_space<vmem>>, vector<2x8x48xf32>
    %c0_2 = arith.constant 0 : index
    %c0_3 = arith.constant 0 : index
    %c0_4 = arith.constant 0 : index
    %1 = vector.load %arg1[%c0_2, %c0_3, %c0_4] : memref<2x8x48xf32, #tpu.memory_space<vmem>>, vector<2x8x48xf32>
    %c0_5 = arith.constant 0 : index
    %c0_6 = arith.constant 0 : index
    %c0_7 = arith.constant 0 : index
    %2 = vector.load %arg2[%c0_5, %c0_6, %c0_7] : memref<2x8x48xf32, #tpu.memory_space<vmem>>, vector<2x8x48xf32>
    "tpu.trace_start"() <{level = 10 : i32, message = "bld,bmd->blm"}> : () -> ()
    %cst = arith.constant dense<0.000000e+00> : vector<2x8x8xf32>
    %3 = tpu.matmul %0, %1, %cst {dimension_numbers = #tpu.dot_dimension_numbers<[2], [2], [1], [1], [0, 0, 0, 1, 1, 1], [0], [0]>} : vector<2x8x48xf32>, vector<2x8x48xf32>, vector<2x8x8xf32> -> vector<2x8x8xf32>
    "tpu.trace_stop"() : () -> ()
    %cst_8 = arith.constant 0.144337565 : f32
    %4 = vector.broadcast %cst_8 : f32 to vector<2x8x8xf32>
    %5 = arith.mulf %3, %4 : vector<2x8x8xf32>
    %c0_9 = arith.constant 0 : index
    %c0_10 = arith.constant 0 : index
    %c0_11 = arith.constant 0 : index
    %6 = vector.load %arg3[%c0_9, %c0_10, %c0_11] : memref<2x8x8xi32, #tpu.memory_space<vmem>>, vector<2x8x8xi32>
    %c0_i32 = arith.constant 0 : i32
    %7 = vector.broadcast %c0_i32 : i32 to vector<2x8x8xi32>
    %8 = arith.cmpi ne, %6, %7 : vector<2x8x8xi32>
    %cst_12 = arith.constant 0xFF800000 : f32
    %9 = vector.broadcast %cst_12 : f32 to vector<2x8x8xf32>
    %10 = arith.select %8, %9, %5 : vector<2x8x8xi1>, vector<2x8x8xf32>
    %cst_13 = arith.constant dense<0xFF800000> : vector<2x8xf32>
    %11 = vector.multi_reduction <maximumf>, %10, %cst_13 [2] : vector<2x8x8xf32> to vector<2x8xf32>
    %12 = vector.shape_cast %11 : vector<2x8xf32> to vector<2x8x1xf32>
    %13 = vector.broadcast %12 : vector<2x8x1xf32> to vector<2x8x8xf32>
    %14 = arith.subf %10, %13 : vector<2x8x8xf32>
    %15 = math.exp %14 : vector<2x8x8xf32>
    %cst_14 = arith.constant dense<0.000000e+00> : vector<2x8xf32>
    %16 = vector.multi_reduction <add>, %15, %cst_14 [2] : vector<2x8x8xf32> to vector<2x8xf32>
    %17 = vector.shape_cast %16 : vector<2x8xf32> to vector<2x8x1xf32>
    %18 = tpu.reciprocal %17 : vector<2x8x1xf32> -> vector<2x8x1xf32>
    %19 = vector.broadcast %18 : vector<2x8x1xf32> to vector<2x8x8xf32>
    %20 = arith.mulf %15, %19 : vector<2x8x8xf32>
    %c0_15 = arith.constant 0 : index
    %c0_16 = arith.constant 0 : index
    %c0_17 = arith.constant 0 : index
    %21 = vector.load %arg5[%c0_15, %c0_16, %c0_17] : memref<2x8x8xf32, #tpu.memory_space<vmem>>, vector<2x8x8xf32>
    tpu.vector_store %arg5[%c0_15, %c0_16, %c0_17], %20 {strides = array<i32>} : memref<2x8x8xf32, #tpu.memory_space<vmem>>, vector<2x8x8xf32>,
    "tpu.trace_start"() <{level = 10 : i32, message = "blm,bmd->bld"}> : () -> ()
    %cst_18 = arith.constant dense<0.000000e+00> : vector<2x8x48xf32>
    %22 = tpu.matmul %20, %2, %cst_18 {dimension_numbers = #tpu.dot_dimension_numbers<[2], [1], [1], [2], [0, 0, 0, 1, 1, 2], [0], [0]>} : vector<2x8x8xf32>, vector<2x8x48xf32>, vector<2x8x48xf32> -> vector<2x8x48xf32>
    "tpu.trace_stop"() : () -> ()
    %c0_19 = arith.constant 0 : index
    %c0_20 = arith.constant 0 : index
    %c0_21 = arith.constant 0 : index
    %23 = vector.load %arg4[%c0_19, %c0_20, %c0_21] : memref<2x8x48xf32, #tpu.memory_space<vmem>>, vector<2x8x48xf32>
    tpu.vector_store %arg4[%c0_19, %c0_20, %c0_21], %22 {strides = array<i32>} : memref<2x8x48xf32, #tpu.memory_space<vmem>>, vector<2x8x48xf32>,
    return
  }
}

</mosaic_0001>

<llo_original>
// kernel: tpu_custom_call.1
$region0: #{tpu_custom_call.1}
  #allocation0 [shape = 'u32[]', space=smem, size = 0x4, offset = 0x4, fixed_abs, tag = 'smem constant byte address 0x4 - core index']
  #allocation1 [shape = 'u32[144,128]{1,0:T(1,128)}', space=vmem, size = 0x12000, scoped, tag = 'internal scratch']
  %s0 = inlined_call_operand.hbm [shape: f32[2,8,48], index: 0, kind: input, shape index: {}]
  %s1 = inlined_call_operand.hbm [shape: f32[2,8,48], index: 1, kind: input, shape index: {}]
  %s2 = inlined_call_operand.hbm [shape: f32[2,8,48], index: 2, kind: input, shape index: {}]
  %s3 = inlined_call_operand.hbm [shape: s32[2,8,8], index: 3, kind: input, shape index: {}]
  %s4 = inlined_call_operand.hbm [shape: f32[2,8,48], index: 4, kind: output, shape index: {0}]
  %s5 = inlined_call_operand.hbm [shape: f32[2,8,8], index: 5, kind: output, shape index: {1}]
  %6 = xla_tuple %s4, %s5
  %s7 = sld [smem:[#allocation0]]
  $region50: #{tpu_custom_call.1} parent=0
    _
  %s9 = ssub.s32 1, %s7
  %s10 = scalar_select 0, %s9, %s7
  $region1: #{tpu_custom_call.1} parent=0
    #allocation2 [shape = 'u8[8192]{0}', space=vmem, size = 0x2000, scoped, tag = 'input window, operand 0, single buffered']
    #allocation3 [shape = 's32[1]{0}', space=sflag, size = 0x4, scoped, tag = 'scoped memory for tpu_custom_call.1']
    #allocation4 [shape = 's32[1]{0}', space=sflag, size = 0x4, scoped, tag = 'scoped memory for tpu_custom_call.1']
    #allocation5 [shape = 'u8[8192]{0}', space=vmem, size = 0x2000, scoped, tag = 'input window, operand 1, single buffered']
    #allocation6 [shape = 's32[1]{0}', space=sflag, size = 0x4, scoped, tag = 'scoped memory for tpu_custom_call.1']
    #allocation7 [shape = 'u8[8192]{0}', space=vmem, size = 0x2000, scoped, tag = 'input window, operand 2, single buffered']
    #allocation8 [shape = 'u8[8192]{0}', space=vmem, size = 0x2000, scoped, tag = 'input window, operand 3, single buffered']
    #allocation9 [shape = 's32[1]{0}', space=sflag, size = 0x4, scoped, tag = 'scoped memory for tpu_custom_call.1']
    #allocation10 [shape = 'u8[8192]{0}', space=vmem, size = 0x2000, scoped, tag = 'output window, operand 0, single buffered']
    #allocation11 [shape = 'u8[8192]{0}', space=vmem, size = 0x2000, scoped, tag = 'output window, operand 1, single buffered']
    #allocation12 [shape = 's32[1]{0}', space=sflag, size = 0x4, scoped, tag = 'scoped memory for tpu_custom_call.1']
    %11 = vsyncpa [#allocation3], 0
    %12 = vsyncpa [#allocation6], 0
    %13 = vsyncpa [#allocation9], 0
    %14 = vsyncpa [#allocation4], 0
    %15 = vsyncpa [#allocation12], 0
    // Predicated region
    $region2: #{tpu_custom_call.1} parent=1 // pred_check
      _
    $region3: #{tpu_custom_call.1} parent=1 // pred_check_branch
      %17 = sbr.rel (0) target = $region5
    $region4: #{tpu_custom_call.1} parent=1 // pred_region
      %s19 = ssub.s32 256, 256
      %20 = vsyncadd [#allocation3], %s19
      %s21 = sshll.u32 [#allocation2], 4
      %s22 = int_to_ptr.vmem [resolvable:$true] %s21
      %27 = dma.hbm_to_vmem [thread:$0]  %s0, 256, %s22, [#allocation3], 128, 128, 8
    $region5: #{tpu_custom_call.1} parent=1 // pred_fallthru
      _
    // Predicated region
    $region6: #{tpu_custom_call.1} parent=1 // pred_check
      _
    $region7: #{tpu_custom_call.1} parent=1 // pred_check_branch
      %29 = sbr.rel (0) target = $region9
    $region8: #{tpu_custom_call.1} parent=1 // pred_region
      %s31 = ssub.s32 256, 256
      %32 = vsyncadd [#allocation6], %s31
      %s33 = sshll.u32 [#allocation5], 4
      %s34 = int_to_ptr.vmem [resolvable:$true] %s33
      %39 = dma.hbm_to_vmem [thread:$0]  %s1, 256, %s34, [#allocation6], 128, 128, 8
    $region9: #{tpu_custom_call.1} parent=1 // pred_fallthru
      _
    // Predicated region
    $region10: #{tpu_custom_call.1} parent=1 // pred_check
      _
    $region11: #{tpu_custom_call.1} parent=1 // pred_check_branch
      %41 = sbr.rel (0) target = $region13
    $region12: #{tpu_custom_call.1} parent=1 // pred_region
      %s43 = ssub.s32 256, 256
      %44 = vsyncadd [#allocation6], %s43
      %s45 = sshll.u32 [#allocation7], 4
      %s46 = int_to_ptr.vmem [resolvable:$true] %s45
      %51 = dma.hbm_to_vmem [thread:$0]  %s2, 256, %s46, [#allocation6], 128, 128, 8
    $region13: #{tpu_custom_call.1} parent=1 // pred_fallthru
      _
    // Predicated region
    $region14: #{tpu_custom_call.1} parent=1 // pred_check
      _
    $region15: #{tpu_custom_call.1} parent=1 // pred_check_branch
      %53 = sbr.rel (0) target = $region17
    $region16: #{tpu_custom_call.1} parent=1 // pred_region
      %s55 = ssub.s32 256, 256
      %56 = vsyncadd [#allocation9], %s55
      %s57 = sshll.u32 [#allocation8], 4
      %s58 = int_to_ptr.vmem [resolvable:$true] %s57
      %63 = dma.hbm_to_vmem [thread:$0]  %s3, 256, %s58, [#allocation9], 128, 128, 8
    $region17: #{tpu_custom_call.1} parent=1 // pred_fallthru
      _
    // Predicated region
    $region18: #{tpu_custom_call.1} parent=1 // pred_check
      _
    $region19: #{tpu_custom_call.1} parent=1 // pred_check_branch
      %65 = sbr.rel (0) target = $region21
    $region20: #{tpu_custom_call.1} parent=1 // pred_region
      %66 = dma.done [#allocation3], 256
    $region21: #{tpu_custom_call.1} parent=1 // pred_fallthru
      _
    // Predicated region
    $region22: #{tpu_custom_call.1} parent=1 // pred_check
      _
    $region23: #{tpu_custom_call.1} parent=1 // pred_check_branch
      %68 = sbr.rel (0) target = $region25
    $region24: #{tpu_custom_call.1} parent=1 // pred_region
      %69 = dma.done [#allocation6], 256
    $region25: #{tpu_custom_call.1} parent=1 // pred_fallthru
      _
    // Predicated region
    $region26: #{tpu_custom_call.1} parent=1 // pred_check
      _
    $region27: #{tpu_custom_call.1} parent=1 // pred_check_branch
      %71 = sbr.rel (0) target = $region29
    $region28: #{tpu_custom_call.1} parent=1 // pred_region
      %72 = dma.done [#allocation6], 256
    $region29: #{tpu_custom_call.1} parent=1 // pred_fallthru
      _
    // Predicated region
    $region30: #{tpu_custom_call.1} parent=1 // pred_check
      _
    $region31: #{tpu_custom_call.1} parent=1 // pred_check_branch
      %74 = sbr.rel (0) target = $region33
    $region32: #{tpu_custom_call.1} parent=1 // pred_region
      %75 = dma.done [#allocation9], 256
    $region33: #{tpu_custom_call.1} parent=1 // pred_fallthru
      _
    %v76 = vld [vmem:[#allocation2] sm:$0xff]
    %v77 = vld [vmem:[#allocation2 + $0x8] sm:$0xff]
    %v78 = vld [vmem:[#allocation5] sm:$0xff]
    %v79 = vld [vmem:[#allocation5 + $0x8] sm:$0xff]
    %v80 = vld [vmem:[#allocation7] sm:$0xff]
    %v81 = vld [vmem:[#allocation7 + $0x8] sm:$0xff]
    %vm82 = vcmask 392192
    %v84 = vsel %vm82, %v76, 0
    %v87 = vsel %vm82, %v78, 0
    %89 = vmatprep.subr.mxu0 0.0
    %90 = vmatpush1.xpose.msra.mxu0 0.0
    %91 = vmatprep.subr.mxu0 0.0
    %92 = vmatpush1.xpose.msra.mxu0 0.0
    %93 = vmatprep.subr.mxu0 0.0
    %94 = vmatpush1.xpose.msra.mxu0 0.0
    %95 = vmatprep.subr.mxu0 0.0
    %96 = vmatpush1.xpose.msra.mxu0 0.0
    %97 = vmatprep.subr.mxu0 0.0
    %98 = vmatpush1.xpose.msra.mxu0 0.0
    %99 = vmatprep.subr.mxu0 0.0
    %100 = vmatpush1.xpose.msra.mxu0 0.0
    %101 = vmatprep.subr.mxu0 0.0
    %102 = vmatpush1.xpose.msra.mxu0 0.0
    %103 = vmatprep.subr.mxu0 0.0
    %104 = vmatpush1.xpose.msra.mxu0 0.0
    %105 = vmatprep.subr.mxu0 0.0
    %106 = vmatpush1.xpose.msra.mxu0 0.0
    %107 = vmatprep.subr.mxu0 0.0
    %108 = vmatpush1.xpose.msra.mxu0 0.0
    %109 = vmatprep.subr.mxu0 0.0
    %110 = vmatpush1.xpose.msra.mxu0 0.0
    %111 = vmatprep.subr.mxu0 0.0
    %112 = vmatpush1.xpose.msra.mxu0 0.0
    %113 = vmatprep.subr.mxu0 0.0
    %114 = vmatpush1.xpose.msra.mxu0 0.0
    %115 = vmatprep.subr.mxu0 0.0
    %116 = vmatpush1.xpose.msra.mxu0 0.0
    %117 = vmatprep.subr.mxu0 0.0
    %118 = vmatpush1.xpose.msra.mxu0 0.0
    %119 = vmatprep.subr.mxu0 0.0
    %120 = vmatpush1.xpose.msra.mxu0 %v87
    %121 = vmatprep.subr.mxu0 0.0
    %122 = vmatpush2.xpose.msra.mxu0 0.0
    %123 = vmatprep.subr.mxu0 0.0
    %124 = vmatpush2.xpose.msra.mxu0 0.0
    %125 = vmatprep.subr.mxu0 0.0
    %126 = vmatpush2.xpose.msra.mxu0 0.0
    %127 = vmatprep.subr.mxu0 0.0
    %128 = vmatpush2.xpose.msra.mxu0 0.0
    %129 = vmatprep.subr.mxu0 0.0
    %130 = vmatpush2.xpose.msra.mxu0 0.0
    %131 = vmatprep.subr.mxu0 0.0
    %132 = vmatpush2.xpose.msra.mxu0 0.0
    %133 = vmatprep.subr.mxu0 0.0
    %134 = vmatpush2.xpose.msra.mxu0 0.0
    %135 = vmatprep.subr.mxu0 0.0
    %136 = vmatpush2.xpose.msra.mxu0 0.0
    %137 = vmatprep.subr.mxu0 0.0
    %138 = vmatpush2.xpose.msra.mxu0 0.0
    %139 = vmatprep.subr.mxu0 0.0
    %140 = vmatpush2.xpose.msra.mxu0 0.0
    %141 = vmatprep.subr.mxu0 0.0
    %142 = vmatpush2.xpose.msra.mxu0 0.0
    %143 = vmatprep.subr.mxu0 0.0
    %144 = vmatpush2.xpose.msra.mxu0 0.0
    %145 = vmatprep.subr.mxu0 0.0
    %146 = vmatpush2.xpose.msra.mxu0 0.0
    %147 = vmatprep.subr.mxu0 0.0
    %148 = vmatpush2.xpose.msra.mxu0 0.0
    %149 = vmatprep.subr.mxu0 0.0
    %150 = vmatpush2.xpose.msra.mxu0 0.0
    %151 = vmatprep.subr.mxu0 0.0
    %152 = vmatpush2.xpose.msra.mxu0 0.0
    %153 = vmatprep.mubr.f32.mxu0 0.0
    %154 = vmatmul.mubr.f32.gmra.mxu0 %v84
    %v155 = vpop.f32.mrf.mxu0
    %v156 = vadd.f32 0.0, %v155
    %v157 = vpop.f32.mrf.mxu0
    %158 = vdwg.mxu0
    %v160 = vsel %vm82, %v77, 0
    %v163 = vsel %vm82, %v79, 0
    %165 = vmatprep.subr.mxu0 0.0
    %166 = vmatpush1.xpose.msra.mxu0 0.0
    %167 = vmatprep.subr.mxu0 0.0
    %168 = vmatpush1.xpose.msra.mxu0 0.0
    %169 = vmatprep.subr.mxu0 0.0
    %170 = vmatpush1.xpose.msra.mxu0 0.0
    %171 = vmatprep.subr.mxu0 0.0
    %172 = vmatpush1.xpose.msra.mxu0 0.0
    %173 = vmatprep.subr.mxu0 0.0
    %174 = vmatpush1.xpose.msra.mxu0 0.0
    %175 = vmatprep.subr.mxu0 0.0
    %176 = vmatpush1.xpose.msra.mxu0 0.0
    %177 = vmatprep.subr.mxu0 0.0
    %178 = vmatpush1.xpose.msra.mxu0 0.0
    %179 = vmatprep.subr.mxu0 0.0
    %180 = vmatpush1.xpose.msra.mxu0 0.0
    %181 = vmatprep.subr.mxu0 0.0
    %182 = vmatpush1.xpose.msra.mxu0 0.0
    %183 = vmatprep.subr.mxu0 0.0
    %184 = vmatpush1.xpose.msra.mxu0 0.0
    %185 = vmatprep.subr.mxu0 0.0
    %186 = vmatpush1.xpose.msra.mxu0 0.0
    %187 = vmatprep.subr.mxu0 0.0
    %188 = vmatpush1.xpose.msra.mxu0 0.0
    %189 = vmatprep.subr.mxu0 0.0
    %190 = vmatpush1.xpose.msra.mxu0 0.0
    %191 = vmatprep.subr.mxu0 0.0
    %192 = vmatpush1.xpose.msra.mxu0 0.0
    %193 = vmatprep.subr.mxu0 0.0
    %194 = vmatpush1.xpose.msra.mxu0 0.0
    %195 = vmatprep.subr.mxu0 0.0
    %196 = vmatpush1.xpose.msra.mxu0 %v163
    %197 = vmatprep.subr.mxu0 0.0
    %198 = vmatpush2.xpose.msra.mxu0 0.0
    %199 = vmatprep.subr.mxu0 0.0
    %200 = vmatpush2.xpose.msra.mxu0 0.0
    %201 = vmatprep.subr.mxu0 0.0
    %202 = vmatpush2.xpose.msra.mxu0 0.0
    %203 = vmatprep.subr.mxu0 0.0
    %204 = vmatpush2.xpose.msra.mxu0 0.0
    %205 = vmatprep.subr.mxu0 0.0
    %206 = vmatpush2.xpose.msra.mxu0 0.0
    %207 = vmatprep.subr.mxu0 0.0
    %208 = vmatpush2.xpose.msra.mxu0 0.0
    %209 = vmatprep.subr.mxu0 0.0
    %210 = vmatpush2.xpose.msra.mxu0 0.0
    %211 = vmatprep.subr.mxu0 0.0
    %212 = vmatpush2.xpose.msra.mxu0 0.0
    %213 = vmatprep.subr.mxu0 0.0
    %214 = vmatpush2.xpose.msra.mxu0 0.0
    %215 = vmatprep.subr.mxu0 0.0
    %216 = vmatpush2.xpose.msra.mxu0 0.0
    %217 = vmatprep.subr.mxu0 0.0
    %218 = vmatpush2.xpose.msra.mxu0 0.0
    %219 = vmatprep.subr.mxu0 0.0
    %220 = vmatpush2.xpose.msra.mxu0 0.0
    %221 = vmatprep.subr.mxu0 0.0
    %222 = vmatpush2.xpose.msra.mxu0 0.0
    %223 = vmatprep.subr.mxu0 0.0
    %224 = vmatpush2.xpose.msra.mxu0 0.0
    %225 = vmatprep.subr.mxu0 0.0
    %226 = vmatpush2.xpose.msra.mxu0 0.0
    %227 = vmatprep.subr.mxu0 0.0
    %228 = vmatpush2.xpose.msra.mxu0 0.0
    %229 = vmatprep.mubr.f32.mxu0 0.0
    %230 = vmatmul.mubr.f32.gmra.mxu0 %v160
    %v231 = vpop.f32.mrf.mxu0
    %v232 = vadd.f32 0.0, %v231
    %v233 = vpop.f32.mrf.mxu0
    %234 = vdwg.mxu0
    %v235 = vmul.f32 %v156, 0.14433756
    %v236 = vmul.f32 %v232, 0.14433756
    %v237 = vld [vmem:[#allocation8] sm:$0xff]
    %v238 = vld [vmem:[#allocation8 + $0x8] sm:$0xff]
    %vm239 = vcmp.ne.s32.totalorder %v237, 0
    %vm240 = vcmp.ne.s32.totalorder %v238, 0
    %v241 = vsel %vm239, -inf, %v235
    %v242 = vsel %vm240, -inf, %v236
    %vm243 = vcmask 64512
    %v244 = vsel %vm243, %v241, -inf
    %245 = vmax.xlane.f32.xlu0 %v244
    %v246 = vpop.xlane.xlu0 %245
    %v247 = vsel %vm243, %v242, -inf
    %248 = vmax.xlane.f32.xlu0 %v247
    %v249 = vpop.xlane.xlu0 %248
    %v250 = vsub.f32 %v241, %v246
    %v251 = vsub.f32 %v242, %v249
    %v252 = vmul.f32 %v250, 1.442695
    %v253 = vpow.pop %v252
    %v254 = vmul.f32 %v251, 1.442695
    %v255 = vpow.pop %v254
    %v256 = vsel %vm243, %v253, 0.0
    %257 = vadd.xlane.f32.xlu0 %v256
    %v258 = vpop.xlane.xlu0 %257
    %v259 = vsel %vm243, %v255, 0.0
    %260 = vadd.xlane.f32.xlu0 %v259
    %v261 = vpop.xlane.xlu0 %260
    %v262 = vrcp.pop %v258
    %v263 = vrcp.pop %v261
    %v264 = vmul.f32 %v253, %v262
    %v265 = vmul.f32 %v255, %v263
    %266 = vst.msk [vmem:[#allocation11] sm:$0xff] %vm243, %v264
    %267 = vst.msk [vmem:[#allocation11 + $0x8] sm:$0xff] %vm243, %v265
    %v269 = vsel %vm243, %v264, 0
    %271 = vmatprep.subr.mxu0 0.0
    %272 = vmatpush1.msra.mxu0 0.0
    %273 = vmatprep.subr.mxu0 0.0
    %274 = vmatpush1.msra.mxu0 0.0
    %275 = vmatprep.subr.mxu0 0.0
    %276 = vmatpush1.msra.mxu0 0.0
    %277 = vmatprep.subr.mxu0 0.0
    %278 = vmatpush1.msra.mxu0 0.0
    %279 = vmatprep.subr.mxu0 0.0
    %280 = vmatpush1.msra.mxu0 0.0
    %281 = vmatprep.subr.mxu0 0.0
    %282 = vmatpush1.msra.mxu0 0.0
    %283 = vmatprep.subr.mxu0 0.0
    %284 = vmatpush1.msra.mxu0 0.0
    %285 = vmatprep.subr.mxu0 0.0
    %286 = vmatpush1.msra.mxu0 0.0
    %287 = vmatprep.subr.mxu0 0.0
    %288 = vmatpush1.msra.mxu0 0.0
    %289 = vmatprep.subr.mxu0 0.0
    %290 = vmatpush1.msra.mxu0 0.0
    %291 = vmatprep.subr.mxu0 0.0
    %292 = vmatpush1.msra.mxu0 0.0
    %293 = vmatprep.subr.mxu0 0.0
    %294 = vmatpush1.msra.mxu0 0.0
    %295 = vmatprep.subr.mxu0 0.0
    %296 = vmatpush1.msra.mxu0 0.0
    %297 = vmatprep.subr.mxu0 0.0
    %298 = vmatpush1.msra.mxu0 0.0
    %299 = vmatprep.subr.mxu0 0.0
    %300 = vmatpush1.msra.mxu0 0.0
    %301 = vmatprep.subr.mxu0 0.0
    %302 = vmatpush1.msra.mxu0 %v80
    %303 = vmatprep.subr.mxu0 0.0
    %304 = vmatpush2.msra.mxu0 0.0
    %305 = vmatprep.subr.mxu0 0.0
    %306 = vmatpush2.msra.mxu0 0.0
    %307 = vmatprep.subr.mxu0 0.0
    %308 = vmatpush2.msra.mxu0 0.0
    %309 = vmatprep.subr.mxu0 0.0
    %310 = vmatpush2.msra.mxu0 0.0
    %311 = vmatprep.subr.mxu0 0.0
    %312 = vmatpush2.msra.mxu0 0.0
    %313 = vmatprep.subr.mxu0 0.0
    %314 = vmatpush2.msra.mxu0 0.0
    %315 = vmatprep.subr.mxu0 0.0
    %316 = vmatpush2.msra.mxu0 0.0
    %317 = vmatprep.subr.mxu0 0.0
    %318 = vmatpush2.msra.mxu0 0.0
    %319 = vmatprep.subr.mxu0 0.0
    %320 = vmatpush2.msra.mxu0 0.0
    %321 = vmatprep.subr.mxu0 0.0
    %322 = vmatpush2.msra.mxu0 0.0
    %323 = vmatprep.subr.mxu0 0.0
    %324 = vmatpush2.msra.mxu0 0.0
    %325 = vmatprep.subr.mxu0 0.0
    %326 = vmatpush2.msra.mxu0 0.0
    %327 = vmatprep.subr.mxu0 0.0
    %328 = vmatpush2.msra.mxu0 0.0
    %329 = vmatprep.subr.mxu0 0.0
    %330 = vmatpush2.msra.mxu0 0.0
    %331 = vmatprep.subr.mxu0 0.0
    %332 = vmatpush2.msra.mxu0 0.0
    %333 = vmatprep.subr.mxu0 0.0
    %334 = vmatpush2.msra.mxu0 0.0
    %335 = vmatprep.mubr.f32.mxu0 0.0
    %336 = vmatmul.mubr.f32.gmra.mxu0 %v269
    %v337 = vpop.f32.mrf.mxu0
    %v338 = vadd.f32 0.0, %v337
    %v339 = vpop.f32.mrf.mxu0
    %340 = vdwg.mxu0
    %v342 = vsel %vm243, %v265, 0
    %344 = vmatprep.subr.mxu0 0.0
    %345 = vmatpush1.msra.mxu0 0.0
    %346 = vmatprep.subr.mxu0 0.0
    %347 = vmatpush1.msra.mxu0 0.0
    %348 = vmatprep.subr.mxu0 0.0
    %349 = vmatpush1.msra.mxu0 0.0
    %350 = vmatprep.subr.mxu0 0.0
    %351 = vmatpush1.msra.mxu0 0.0
    %352 = vmatprep.subr.mxu0 0.0
    %353 = vmatpush1.msra.mxu0 0.0
    %354 = vmatprep.subr.mxu0 0.0
    %355 = vmatpush1.msra.mxu0 0.0
    %356 = vmatprep.subr.mxu0 0.0
    %357 = vmatpush1.msra.mxu0 0.0
    %358 = vmatprep.subr.mxu0 0.0
    %359 = vmatpush1.msra.mxu0 0.0
    %360 = vmatprep.subr.mxu0 0.0
    %361 = vmatpush1.msra.mxu0 0.0
    %362 = vmatprep.subr.mxu0 0.0
    %363 = vmatpush1.msra.mxu0 0.0
    %364 = vmatprep.subr.mxu0 0.0
    %365 = vmatpush1.msra.mxu0 0.0
    %366 = vmatprep.subr.mxu0 0.0
    %367 = vmatpush1.msra.mxu0 0.0
    %368 = vmatprep.subr.mxu0 0.0
    %369 = vmatpush1.msra.mxu0 0.0
    %370 = vmatprep.subr.mxu0 0.0
    %371 = vmatpush1.msra.mxu0 0.0
    %372 = vmatprep.subr.mxu0 0.0
    %373 = vmatpush1.msra.mxu0 0.0
    %374 = vmatprep.subr.mxu0 0.0
    %375 = vmatpush1.msra.mxu0 %v81
    %376 = vmatprep.subr.mxu0 0.0
    %377 = vmatpush2.msra.mxu0 0.0
    %378 = vmatprep.subr.mxu0 0.0
    %379 = vmatpush2.msra.mxu0 0.0
    %380 = vmatprep.subr.mxu0 0.0
    %381 = vmatpush2.msra.mxu0 0.0
    %382 = vmatprep.subr.mxu0 0.0
    %383 = vmatpush2.msra.mxu0 0.0
    %384 = vmatprep.subr.mxu0 0.0
    %385 = vmatpush2.msra.mxu0 0.0
    %386 = vmatprep.subr.mxu0 0.0
    %387 = vmatpush2.msra.mxu0 0.0
    %388 = vmatprep.subr.mxu0 0.0
    %389 = vmatpush2.msra.mxu0 0.0
    %390 = vmatprep.subr.mxu0 0.0
    %391 = vmatpush2.msra.mxu0 0.0
    %392 = vmatprep.subr.mxu0 0.0
    %393 = vmatpush2.msra.mxu0 0.0
    %394 = vmatprep.subr.mxu0 0.0
    %395 = vmatpush2.msra.mxu0 0.0
    %396 = vmatprep.subr.mxu0 0.0
    %397 = vmatpush2.msra.mxu0 0.0
    %398 = vmatprep.subr.mxu0 0.0
    %399 = vmatpush2.msra.mxu0 0.0
    %400 = vmatprep.subr.mxu0 0.0
    %401 = vmatpush2.msra.mxu0 0.0
    %402 = vmatprep.subr.mxu0 0.0
    %403 = vmatpush2.msra.mxu0 0.0
    %404 = vmatprep.subr.mxu0 0.0
    %405 = vmatpush2.msra.mxu0 0.0
    %406 = vmatprep.subr.mxu0 0.0
    %407 = vmatpush2.msra.mxu0 0.0
    %408 = vmatprep.mubr.f32.mxu0 0.0
    %409 = vmatmul.mubr.f32.gmra.mxu0 %v342
    %v410 = vpop.f32.mrf.mxu0
    %v411 = vadd.f32 0.0, %v410
    %v412 = vpop.f32.mrf.mxu0
    %413 = vdwg.mxu0
    %414 = vst.msk [vmem:[#allocation10] sm:$0xff] %vm82, %v338
    %415 = vst.msk [vmem:[#allocation10 + $0x8] sm:$0xff] %vm82, %v411
    // Predicated region
    $region34: #{tpu_custom_call.1} parent=1 // pred_check
      _
    $region35: #{tpu_custom_call.1} parent=1 // pred_check_branch
      %417 = sbr.rel (0) target = $region37
    $region36: #{tpu_custom_call.1} parent=1 // pred_region
      %s419 = ssub.s32 256, 256
      %420 = vsyncadd [#allocation4], %s419
      %s421 = sshll.u32 [#allocation10], 4
      %s422 = int_to_ptr.vmem [resolvable:$true] %s421
      %427 = dma.vmem_to_hbm [thread:$0]  %s422, 256, %s4, [#allocation4], 128, 128, 8
    $region37: #{tpu_custom_call.1} parent=1 // pred_fallthru
      _
    // Predicated region
    $region38: #{tpu_custom_call.1} parent=1 // pred_check
      _
    $region39: #{tpu_custom_call.1} parent=1 // pred_check_branch
      %429 = sbr.rel (0) target = $region41
    $region40: #{tpu_custom_call.1} parent=1 // pred_region
      %s431 = ssub.s32 256, 256
      %432 = vsyncadd [#allocation12], %s431
      %s433 = sshll.u32 [#allocation11], 4
      %s434 = int_to_ptr.vmem [resolvable:$true] %s433
      %439 = dma.vmem_to_hbm [thread:$0]  %s434, 256, %s5, [#allocation12], 128, 128, 8
    $region41: #{tpu_custom_call.1} parent=1 // pred_fallthru
      _
    // Predicated region
    $region42: #{tpu_custom_call.1} parent=1 // pred_check
      _
    $region43: #{tpu_custom_call.1} parent=1 // pred_check_branch
      %441 = sbr.rel (0) target = $region45
    $region44: #{tpu_custom_call.1} parent=1 // pred_region
      %442 = dma.done [#allocation4], 256
    $region45: #{tpu_custom_call.1} parent=1 // pred_fallthru
      _
    // Predicated region
    $region46: #{tpu_custom_call.1} parent=1 // pred_check
      _
    $region47: #{tpu_custom_call.1} parent=1 // pred_check_branch
      %444 = sbr.rel (0) target = $region49
    $region48: #{tpu_custom_call.1} parent=1 // pred_region
      %445 = dma.done [#allocation12], 256
    $region49: #{tpu_custom_call.1} parent=1 // pred_fallthru
      _
    %446 = vsyncpa [#allocation3], 1
    %447 = vsyncpa [#allocation6], 1
    %448 = vsyncpa [#allocation9], 1
    %449 = vsyncpa [#allocation4], 1
    %450 = vsyncpa [#allocation12], 1

</llo_original>
